<compile_context>
chip_gen: v6e
topology: v6e:2x2x1
jax: 0.10.0
libtpu: 0.0.40
codegen_flags: <defaults>
</compile_context>

<pallas_src>
import jax
import jax.numpy as jnp
from jax.experimental import pallas as pl
from jax.experimental.pallas import tpu as pltpu


def _roundup(x, m):
    return (x + m - 1) // m * m


def decoder_kernel(emb_ref, st_ref, ht_ref, wg_ref, wdp_ref, small_ref,
                   pred_ref, state_ref, h_scr):
    """One decode step. Grid axis 0 tiles the vocab (output projection).

    Attention + GRU run only at grid step 0; the new hidden state stays
    resident in VMEM scratch, and every grid step emits one lane-dense
    (B_pad, TILE_V) slab of the output projection.
    """
    j = pl.program_id(0)

    B, E = emb_ref.shape
    H = state_ref.shape[1]
    S = ht_ref.shape[1]
    H2, H3 = 2 * H, 3 * H

    @pl.when(j == 0)
    def _():
        emb = emb_ref[...]                      # (B, E)
        st = st_ref[...]                        # (B, H)
        ht = ht_ref[...]                        # (B, S, 2H)  batch-major

        wa = small_ref[0:1, :H3]                # (1, 3H) attention Linear weight
        b_ih = small_ref[1:2, :H3]              # (1, 3H)
        b_hh = small_ref[2:3, :H3]              # (1, 3H)
        ba = small_ref[3:4, 0:1]                # (1, 1)  attention Linear bias

        wa_s = wa[:, :H]                        # (1, H)
        wa_h = wa[:, H:]                        # (1, 2H)

        # --- Attention energies: reductions over the feature (lane) axis ---
        e_s = jnp.sum(st * wa_s, axis=1, keepdims=True)             # (B, 1)
        e_h = jnp.sum(ht * wa_h[:, None, :], axis=2)                # (B, S)
        energy = jnp.maximum(e_s + e_h + ba, 0.0)                   # ReLU

        # Softmax over the sequence, which now lives on the lane axis.
        m = jnp.max(energy, axis=1, keepdims=True)
        ex = jnp.exp(energy - m)
        w = ex / jnp.sum(ex, axis=1, keepdims=True)                 # (B, S)

        # Context: ct[b, :] = sum_s w[b, s] * ht[b, s, :]   (== bmm in ref)
        ct = jnp.sum(w[:, :, None] * ht, axis=1)                    # (B, 2H)

        # --- GRU cell: concat replaced by two accumulating matmuls ---
        wih_e = wg_ref[:E, :]                   # (E,  3H)
        wih_c = wg_ref[E:E + H2, :]             # (2H, 3H)
        whh = wg_ref[E + H2:, :]                # (H,  3H)

        gi = (jnp.dot(emb, wih_e, preferred_element_type=jnp.float32)
              + jnp.dot(ct, wih_c, preferred_element_type=jnp.float32)
              + b_ih)                                                # (B, 3H)
        gh = jnp.dot(st, whh, preferred_element_type=jnp.float32) + b_hh

        r = jax.nn.sigmoid(gi[:, :H] + gh[:, :H])
        z = jax.nn.sigmoid(gi[:, H:H2] + gh[:, H:H2])
        n = jnp.tanh(gi[:, H2:] + r * gh[:, H2:])
        h_new = (1.0 - z) * n + z * st                               # (B, H)

        h_scr[...] = h_new
        state_ref[...] = h_new

    # --- Output projection for this vocab tile (lane-dense stores) ---
    h = h_scr[...]
    wd = wdp_ref[:H, :]                         # (H, TILE_V)
    bd = wdp_ref[H:H + 1, :]                    # (1, TILE_V)  bias packed as extra row
    pred_ref[...] = jnp.dot(h, wd, preferred_element_type=jnp.float32) + bd


def pack_decoder_params(params):
    """One-time pre-transpose / pre-pad / pre-pack of the decoder weights.

    Done once, outside the per-token decode loop, so no per-step XLA
    transposes / HBM rewrites are emitted.
    """
    emb = params["emb"].astype(jnp.float32)
    V, E = emb.shape
    H = params["w_hh"].shape[1]
    H2, H3 = 2 * H, 3 * H
    assert E % 8 == 0 and H % 8 == 0, "E and H must be sublane (8) multiples"

    # GRU weights, pre-transposed and row-stacked: [emb rows | context rows | hidden rows]
    wih_t = params["w_ih"].T.astype(jnp.float32)          # (E+2H, 3H)
    whh_t = params["w_hh"].T.astype(jnp.float32)          # (H,    3H)
    w_gates = jnp.concatenate([wih_t, whh_t], axis=0)     # (E+2H+H, 3H)

    # Output projection: transposed, bias as an extra row, V padded to 128 lanes.
    V_pad = _roundup(V, 128)
    rows = _roundup(H + 1, 8)
    wd_pack = jnp.zeros((rows, V_pad), jnp.float32)
    wd_pack = wd_pack.at[:H, :V].set(params["w_d"].T.astype(jnp.float32))
    wd_pack = wd_pack.at[H, :V].set(params["b_d"].astype(jnp.float32))

    # All small vectors packed into a single tile: one DMA instead of four.
    W3 = _roundup(H3, 128)
    small = jnp.zeros((4, W3), jnp.float32)
    small = small.at[0, :H3].set(params["wa"][0].astype(jnp.float32))
    small = small.at[1, :H3].set(params["b_ih"].astype(jnp.float32))
    small = small.at[2, :H3].set(params["b_hh"].astype(jnp.float32))
    small = small.at[3, 0].set(params["ba"][0].astype(jnp.float32))

    return {"emb": emb, "w_gates": w_gates, "wd_pack": wd_pack, "small": small,
            "V": V, "V_pad": V_pad, "E": E, "H": H}


def decoder_forward(x_idx, st, ht, packed, *, tile_v=512):
    """Pallas-backed forward of Decoder.forward(x, st, ht)."""
    # Embedding gather (+ dropout, identity at eval / p=0) stays in JAX glue.
    # TODO(synk): for a fused multi-step decode loop, feed token ids via
    # PrefetchScalarGridSpec and gather embedding rows with a pl.Element(1)
    # BlockSpec so weights stay VMEM-resident across steps.
    emb = jnp.take(packed["emb"], x_idx, axis=0)          # (B, E)

    B = emb.shape[0]
    E, H, V, V_pad = packed["E"], packed["H"], packed["V"], packed["V_pad"]
    S = ht.shape[0]
    H2 = 2 * H
    B_pad = _roundup(B, 8)
    TILE_V = min(V_pad, _roundup(tile_v, 128))
    n_vt = V_pad // TILE_V

    # Per-step activations: pad batch to the f32 sublane quantum, batch-major ht.
    emb_p = jnp.pad(emb, ((0, B_pad - B), (0, 0))).astype(jnp.float32)
    st_p = jnp.pad(st[0], ((0, B_pad - B), (0, 0))).astype(jnp.float32)
    ht_p = jnp.pad(jnp.transpose(ht, (1, 0, 2)),
                   ((0, B_pad - B), (0, 0), (0, 0))).astype(jnp.float32)

    w_gates = packed["w_gates"]
    wd_pack = packed["wd_pack"]
    small = packed["small"]
    rows = wd_pack.shape[0]
    W3 = small.shape[1]

    pred_p, h_new_p = pl.pallas_call(
        decoder_kernel,
        out_shape=(jax.ShapeDtypeStruct((B_pad, V_pad), jnp.float32),
                   jax.ShapeDtypeStruct((B_pad, H), jnp.float32)),
        grid=(n_vt,),
        in_specs=[
            pl.BlockSpec((B_pad, E), lambda j: (0, 0)),
            pl.BlockSpec((B_pad, H), lambda j: (0, 0)),
            pl.BlockSpec((B_pad, S, H2), lambda j: (0, 0, 0)),
            pl.BlockSpec((E + H2 + H, 3 * H), lambda j: (0, 0)),
            pl.BlockSpec((rows, TILE_V), lambda j: (0, j)),
            pl.BlockSpec((4, W3), lambda j: (0, 0)),
        ],
        out_specs=(
            pl.BlockSpec((B_pad, TILE_V), lambda j: (0, j)),
            pl.BlockSpec((B_pad, H), lambda j: (0, 0)),
        ),
        scratch_shapes=[pltpu.VMEM((B_pad, H), jnp.float32)],
        compiler_params=pltpu.CompilerParams(
            dimension_semantics=("arbitrary",)),
    )(emb_p, st_p, ht_p, w_gates, wd_pack, small)

    return pred_p[:B, :V], h_new_p[:B][None]               # state shape (1, B, H)


def decoder_reference(x_idx, st, ht, params):
    """Pure-JAX re-implementation of the PyTorch forward, for verification."""
    emb = jnp.take(params["emb"], x_idx, axis=0)[None]                 # (1, B, E)
    S = ht.shape[0]
    H = st.shape[-1]
    st_rep = jnp.broadcast_to(st, (S,) + st.shape[1:])                 # repeat
    concat = jnp.concatenate([st_rep, ht], axis=2)                     # (S, B, 3H)
    energy = jax.nn.relu(concat @ params["wa"].T + params["ba"])       # (S, B, 1)
    weights = jax.nn.softmax(energy, axis=0)                           # (S, B, 1)
    w_perm = jnp.transpose(weights, (1, 2, 0))                         # (B, 1, S)
    ct = jnp.einsum("bos,bsh->boh", w_perm, jnp.transpose(ht, (1, 0, 2)))
    ct = jnp.transpose(ct, (1, 0, 2))                                  # (1, B, 2H)
    x = jnp.concatenate([emb, ct], axis=2)[0]                          # (B, E+2H)
    st0 = st[0]
    gi = x @ params["w_ih"].T + params["b_ih"]
    gh = st0 @ params["w_hh"].T + params["b_hh"]
    r = jax.nn.sigmoid(gi[:, :H] + gh[:, :H])
    z = jax.nn.sigmoid(gi[:, H:2 * H] + gh[:, H:2 * H])
    n = jnp.tanh(gi[:, 2 * H:] + r * gh[:, 2 * H:])
    h_new = (1.0 - z) * n + z * st0
    pred = h_new @ params["w_d"].T + params["b_d"]
    return pred, h_new[None]


def init_params(key, V, E, H):
    ks = jax.random.split(key, 9)
    u = lambda k, shape, scale: jax.random.uniform(k, shape, jnp.float32, -scale, scale)
    return {
        "emb":  u(ks[0], (V, E), 0.1),
        "wa":   u(ks[1], (1, 3 * H), (3 * H) ** -0.5),        # Attention Linear(3H -> 1)
        "ba":   u(ks[2], (1,), (3 * H) ** -0.5),
        "w_ih": u(ks[3], (3 * H, E + 2 * H), H ** -0.5),       # GRU weight_ih_l0
        "b_ih": u(ks[4], (3 * H,), H ** -0.5),
        "w_hh": u(ks[5], (3 * H, H), H ** -0.5),               # GRU weight_hh_l0
        "b_hh": u(ks[6], (3 * H,), H ** -0.5),
        "w_d":  u(ks[7], (V, H), H ** -0.5),                   # dense Linear(H -> V)
        "b_d":  u(ks[8], (V,), H ** -0.5),
    }


if __name__ == "__main__":
    # Small shapes consistent with the module: layers=1 (required by the
    # reference Attention code), p=0.0 (dropout is identity).
    V, E, H, S, B = 32, 16, 32, 8, 4

    key = jax.random.PRNGKey(0)
    k_p, k_x, k_st, k_ht = jax.random.split(key, 4)

    params = init_params(k_p, V, E, H)
    x_idx = jax.random.randint(k_x, (B,), 0, V, dtype=jnp.int32)
    st = jax.random.normal(k_st, (1, B, H), jnp.float32)
    ht = jax.random.normal(k_ht, (S, B, 2 * H), jnp.float32)

    packed = pack_decoder_params(params)          # one-time weight packing
    pred, state = decoder_forward(x_idx, st, ht, packed)
    pred = jax.block_until_ready(pred)
    state = jax.block_until_ready(state)

    pred_ref, state_ref = decoder_reference(x_idx, st, ht, params)
    assert pred.shape == (B, V) and state.shape == (1, B, H)
    assert jnp.allclose(pred, pred_ref, atol=1e-4, rtol=1e-4)
    assert jnp.allclose(state, state_ref, atol=1e-4, rtol=1e-4)

    print("KERNEL_OK")
</pallas_src>

<mosaic_0001>
module attributes {stable_mosaic.version = 11 : i64} {
  func.func @decoder_kernel(%arg0: i32, %arg1: memref<8x16xf32, #tpu.memory_space<vmem>>, %arg2: memref<8x32xf32, #tpu.memory_space<vmem>>, %arg3: memref<8x8x64xf32, #tpu.memory_space<vmem>>, %arg4: memref<112x96xf32, #tpu.memory_space<vmem>>, %arg5: memref<40x128xf32, #tpu.memory_space<vmem>>, %arg6: memref<4x128xf32, #tpu.memory_space<vmem>>, %arg7: memref<8x128xf32, #tpu.memory_space<vmem>>, %arg8: memref<8x32xf32, #tpu.memory_space<vmem>>, %arg9: memref<8x32xf32, #tpu.memory_space<vmem>>) attributes {dimension_semantics = [#tpu.dimension_semantics<arbitrary>], iteration_bounds = array<i64: 1>, scalar_prefetch = 0 : i64, scratch_operands = 1 : i64, tpu.core_type = #tpu.core_type<tc>, window_params = [{pipeline_mode = #tpu.pipeline_mode<synchronous>, transform_indices = @transform_0, window_bounds = array<i64: 8, 16>}, {pipeline_mode = #tpu.pipeline_mode<synchronous>, transform_indices = @transform_1, window_bounds = array<i64: 8, 32>}, {pipeline_mode = #tpu.pipeline_mode<synchronous>, transform_indices = @transform_2, window_bounds = array<i64: 8, 8, 64>}, {pipeline_mode = #tpu.pipeline_mode<synchronous>, transform_indices = @transform_3, window_bounds = array<i64: 112, 96>}, {transform_indices = @transform_4, window_bounds = array<i64: 40, 128>}, {pipeline_mode = #tpu.pipeline_mode<synchronous>, transform_indices = @transform_5, window_bounds = array<i64: 4, 128>}, {transform_indices = @transform_6, window_bounds = array<i64: 8, 128>}, {pipeline_mode = #tpu.pipeline_mode<synchronous>, transform_indices = @transform_7, window_bounds = array<i64: 8, 32>}]} {
    %c0_i32 = arith.constant 0 : i32
    %0 = arith.cmpi eq, %arg0, %c0_i32 : i32
    %1 = arith.extui %0 : i1 to i32
    %c0_i32_0 = arith.constant 0 : i32
    %2 = arith.cmpi ne, %1, %c0_i32_0 : i32
    scf.if %2 {
      %c0_7 = arith.constant 0 : index
      %c0_8 = arith.constant 0 : index
      %10 = vector.load %arg1[%c0_7, %c0_8] : memref<8x16xf32, #tpu.memory_space<vmem>>, vector<8x16xf32>
      %c0_9 = arith.constant 0 : index
      %c0_10 = arith.constant 0 : index
      %11 = vector.load %arg2[%c0_9, %c0_10] : memref<8x32xf32, #tpu.memory_space<vmem>>, vector<8x32xf32>
      %c0_11 = arith.constant 0 : index
      %c0_12 = arith.constant 0 : index
      %c0_13 = arith.constant 0 : index
      %12 = vector.load %arg3[%c0_11, %c0_12, %c0_13] : memref<8x8x64xf32, #tpu.memory_space<vmem>>, vector<8x8x64xf32>
      %c0_14 = arith.constant 0 : index
      %c0_15 = arith.constant 0 : index
      %13 = vector.load %arg6[%c0_14, %c0_15] : memref<4x128xf32, #tpu.memory_space<vmem>>, vector<1x96xf32>
      %c1 = arith.constant 1 : index
      %c0_16 = arith.constant 0 : index
      %14 = vector.load %arg6[%c1, %c0_16] : memref<4x128xf32, #tpu.memory_space<vmem>>, vector<1x96xf32>
      %c2 = arith.constant 2 : index
      %c0_17 = arith.constant 0 : index
      %15 = vector.load %arg6[%c2, %c0_17] : memref<4x128xf32, #tpu.memory_space<vmem>>, vector<1x96xf32>
      %c3 = arith.constant 3 : index
      %c0_18 = arith.constant 0 : index
      %16 = vector.load %arg6[%c3, %c0_18] : memref<4x128xf32, #tpu.memory_space<vmem>>, vector<1x1xf32>
      %17 = vector.extract_strided_slice %13 {offsets = [0, 0], sizes = [1, 32], strides = [1, 1]} : vector<1x96xf32> to vector<1x32xf32>
      %18 = vector.extract_strided_slice %13 {offsets = [0, 32], sizes = [1, 64], strides = [1, 1]} : vector<1x96xf32> to vector<1x64xf32>
      %19 = vector.broadcast %17 : vector<1x32xf32> to vector<8x32xf32>
      %20 = arith.mulf %11, %19 : vector<8x32xf32>
      %cst_19 = arith.constant dense<0.000000e+00> : vector<8xf32>
      %21 = vector.multi_reduction <add>, %20, %cst_19 [1] : vector<8x32xf32> to vector<8xf32>
      %22 = vector.shape_cast %21 : vector<8xf32> to vector<8x1xf32>
      %23 = vector.shape_cast %18 : vector<1x64xf32> to vector<1x1x64xf32>
      %24 = vector.broadcast %23 : vector<1x1x64xf32> to vector<8x8x64xf32>
      %25 = arith.mulf %12, %24 : vector<8x8x64xf32>
      %cst_20 = arith.constant dense<0.000000e+00> : vector<8x8xf32>
      %26 = vector.multi_reduction <add>, %25, %cst_20 [2] : vector<8x8x64xf32> to vector<8x8xf32>
      %27 = vector.broadcast %22 : vector<8x1xf32> to vector<8x8xf32>
      %28 = arith.addf %27, %26 : vector<8x8xf32>
      %29 = vector.broadcast %16 : vector<1x1xf32> to vector<8x8xf32>
      %30 = arith.addf %28, %29 : vector<8x8xf32>
      %cst_21 = arith.constant 0.000000e+00 : f32
      %31 = vector.broadcast %cst_21 : f32 to vector<8x8xf32>
      %32 = arith.maximumf %30, %31 : vector<8x8xf32>
      %cst_22 = arith.constant dense<0xFF800000> : vector<8xf32>
      %33 = vector.multi_reduction <maximumf>, %32, %cst_22 [1] : vector<8x8xf32> to vector<8xf32>
      %34 = vector.shape_cast %33 : vector<8xf32> to vector<8x1xf32>
      %35 = vector.broadcast %34 : vector<8x1xf32> to vector<8x8xf32>
      %36 = arith.subf %32, %35 : vector<8x8xf32>
      %37 = math.exp %36 : vector<8x8xf32>
      %cst_23 = arith.constant dense<0.000000e+00> : vector<8xf32>
      %38 = vector.multi_reduction <add>, %37, %cst_23 [1] : vector<8x8xf32> to vector<8xf32>
      %39 = vector.shape_cast %38 : vector<8xf32> to vector<8x1xf32>
      %40 = vector.broadcast %39 : vector<8x1xf32> to vector<8x8xf32>
      %41 = arith.divf %37, %40 : vector<8x8xf32>
      %42 = vector.shape_cast %41 : vector<8x8xf32> to vector<8x8x1xf32>
      %43 = vector.broadcast %42 : vector<8x8x1xf32> to vector<8x8x64xf32>
      %44 = arith.mulf %43, %12 : vector<8x8x64xf32>
      %cst_24 = arith.constant dense<0.000000e+00> : vector<8x64xf32>
      %45 = vector.multi_reduction <add>, %44, %cst_24 [1] : vector<8x8x64xf32> to vector<8x64xf32>
      %c0_25 = arith.constant 0 : index
      %c0_26 = arith.constant 0 : index
      %46 = vector.load %arg4[%c0_25, %c0_26] : memref<112x96xf32, #tpu.memory_space<vmem>>, vector<16x96xf32>
      %c16 = arith.constant 16 : index
      %c0_27 = arith.constant 0 : index
      %47 = vector.load %arg4[%c16, %c0_27] : memref<112x96xf32, #tpu.memory_space<vmem>>, vector<64x96xf32>
      %c80 = arith.constant 80 : index
      %c0_28 = arith.constant 0 : index
      %48 = vector.load %arg4[%c80, %c0_28] : memref<112x96xf32, #tpu.memory_space<vmem>>, vector<32x96xf32>
      %cst_29 = arith.constant dense<0.000000e+00> : vector<8x96xf32>
      %49 = tpu.matmul %10, %46, %cst_29 {dimension_numbers = #tpu.dot_dimension_numbers<[1], [0], [0], [1], [0, 0, 1, 1], [], []>} : vector<8x16xf32>, vector<16x96xf32>, vector<8x96xf32> -> vector<8x96xf32>
      %cst_30 = arith.constant dense<0.000000e+00> : vector<8x96xf32>
      %50 = tpu.matmul %45, %47, %cst_30 {dimension_numbers = #tpu.dot_dimension_numbers<[1], [0], [0], [1], [0, 0, 1, 1], [], []>} : vector<8x64xf32>, vector<64x96xf32>, vector<8x96xf32> -> vector<8x96xf32>
      %51 = arith.addf %49, %50 : vector<8x96xf32>
      %52 = vector.broadcast %14 : vector<1x96xf32> to vector<8x96xf32>
      %53 = arith.addf %51, %52 : vector<8x96xf32>
      %cst_31 = arith.constant dense<0.000000e+00> : vector<8x96xf32>
      %54 = tpu.matmul %11, %48, %cst_31 {dimension_numbers = #tpu.dot_dimension_numbers<[1], [0], [0], [1], [0, 0, 1, 1], [], []>} : vector<8x32xf32>, vector<32x96xf32>, vector<8x96xf32> -> vector<8x96xf32>
      %55 = vector.broadcast %15 : vector<1x96xf32> to vector<8x96xf32>
      %56 = arith.addf %54, %55 : vector<8x96xf32>
      %57 = vector.extract_strided_slice %53 {offsets = [0, 0], sizes = [8, 32], strides = [1, 1]} : vector<8x96xf32> to vector<8x32xf32>
      %58 = vector.extract_strided_slice %56 {offsets = [0, 0], sizes = [8, 32], strides = [1, 1]} : vector<8x96xf32> to vector<8x32xf32>
      %59 = arith.addf %57, %58 : vector<8x32xf32>
      %60 = arith.negf %59 : vector<8x32xf32>
      %61 = math.exp %60 : vector<8x32xf32>
      %cst_32 = arith.constant 1.000000e+00 : f32
      %62 = vector.broadcast %cst_32 : f32 to vector<8x32xf32>
      %63 = arith.addf %62, %61 : vector<8x32xf32>
      %64 = arith.divf %62, %63 : vector<8x32xf32>
      %65 = vector.extract_strided_slice %53 {offsets = [0, 32], sizes = [8, 32], strides = [1, 1]} : vector<8x96xf32> to vector<8x32xf32>
      %66 = vector.extract_strided_slice %56 {offsets = [0, 32], sizes = [8, 32], strides = [1, 1]} : vector<8x96xf32> to vector<8x32xf32>
      %67 = arith.addf %65, %66 : vector<8x32xf32>
      %68 = arith.negf %67 : vector<8x32xf32>
      %69 = math.exp %68 : vector<8x32xf32>
      %cst_33 = arith.constant 1.000000e+00 : f32
      %70 = vector.broadcast %cst_33 : f32 to vector<8x32xf32>
      %71 = arith.addf %70, %69 : vector<8x32xf32>
      %72 = arith.divf %70, %71 : vector<8x32xf32>
      %73 = vector.extract_strided_slice %53 {offsets = [0, 64], sizes = [8, 32], strides = [1, 1]} : vector<8x96xf32> to vector<8x32xf32>
      %74 = vector.extract_strided_slice %56 {offsets = [0, 64], sizes = [8, 32], strides = [1, 1]} : vector<8x96xf32> to vector<8x32xf32>
      %75 = arith.mulf %64, %74 : vector<8x32xf32>
      %76 = arith.addf %73, %75 : vector<8x32xf32>
      %77 = math.tanh %76 : vector<8x32xf32>
      %cst_34 = arith.constant 1.000000e+00 : f32
      %78 = vector.broadcast %cst_34 : f32 to vector<8x32xf32>
      %79 = arith.subf %78, %72 : vector<8x32xf32>
      %80 = arith.mulf %79, %77 : vector<8x32xf32>
      %81 = arith.mulf %72, %11 : vector<8x32xf32>
      %82 = arith.addf %80, %81 : vector<8x32xf32>
      %c0_35 = arith.constant 0 : index
      %c0_36 = arith.constant 0 : index
      %83 = vector.load %arg9[%c0_35, %c0_36] : memref<8x32xf32, #tpu.memory_space<vmem>>, vector<8x32xf32>
      tpu.vector_store %arg9[%c0_35, %c0_36], %82 {strides = array<i32>} : memref<8x32xf32, #tpu.memory_space<vmem>>, vector<8x32xf32>,
      %c0_37 = arith.constant 0 : index
      %c0_38 = arith.constant 0 : index
      %84 = vector.load %arg8[%c0_37, %c0_38] : memref<8x32xf32, #tpu.memory_space<vmem>>, vector<8x32xf32>
      tpu.vector_store %arg8[%c0_37, %c0_38], %82 {strides = array<i32>} : memref<8x32xf32, #tpu.memory_space<vmem>>, vector<8x32xf32>,
    } else {
    }
    %c0 = arith.constant 0 : index
    %c0_1 = arith.constant 0 : index
    %3 = vector.load %arg9[%c0, %c0_1] : memref<8x32xf32, #tpu.memory_space<vmem>>, vector<8x32xf32>
    %c0_2 = arith.constant 0 : index
    %c0_3 = arith.constant 0 : index
    %4 = vector.load %arg5[%c0_2, %c0_3] : memref<40x128xf32, #tpu.memory_space<vmem>>, vector<32x128xf32>
    %c32 = arith.constant 32 : index
    %c0_4 = arith.constant 0 : index
    %5 = vector.load %arg5[%c32, %c0_4] : memref<40x128xf32, #tpu.memory_space<vmem>>, vector<1x128xf32>
    %cst = arith.constant dense<0.000000e+00> : vector<8x128xf32>
    %6 = tpu.matmul %3, %4, %cst {dimension_numbers = #tpu.dot_dimension_numbers<[1], [0], [0], [1], [0, 0, 1, 1], [], []>} : vector<8x32xf32>, vector<32x128xf32>, vector<8x128xf32> -> vector<8x128xf32>
    %7 = vector.broadcast %5 : vector<1x128xf32> to vector<8x128xf32>
    %8 = arith.addf %6, %7 : vector<8x128xf32>
    %c0_5 = arith.constant 0 : index
    %c0_6 = arith.constant 0 : index
    %9 = vector.load %arg7[%c0_5, %c0_6] : memref<8x128xf32, #tpu.memory_space<vmem>>, vector<8x128xf32>
    tpu.vector_store %arg7[%c0_5, %c0_6], %8 {strides = array<i32>} : memref<8x128xf32, #tpu.memory_space<vmem>>, vector<8x128xf32>,
    return
  }
  func.func @transform_0(%arg0: i32) -> (i32, i32) {
    %c0_i32 = arith.constant 0 : i32
    %c0_i32_0 = arith.constant 0 : i32
    %c0_i32_1 = arith.constant 0 : i32
    return %c0_i32, %c0_i32_0 : i32, i32
  }
  func.func @transform_1(%arg0: i32) -> (i32, i32) {
    %c0_i32 = arith.constant 0 : i32
    %c0_i32_0 = arith.constant 0 : i32
    %c0_i32_1 = arith.constant 0 : i32
    return %c0_i32, %c0_i32_0 : i32, i32
  }
  func.func @transform_2(%arg0: i32) -> (i32, i32, i32) {
    %c0_i32 = arith.constant 0 : i32
    %c0_i32_0 = arith.constant 0 : i32
    %c0_i32_1 = arith.constant 0 : i32
    %c0_i32_2 = arith.constant 0 : i32
    return %c0_i32, %c0_i32_0, %c0_i32_1 : i32, i32, i32
  }
  func.func @transform_3(%arg0: i32) -> (i32, i32) {
    %c0_i32 = arith.constant 0 : i32
    %c0_i32_0 = arith.constant 0 : i32
    %c0_i32_1 = arith.constant 0 : i32
    return %c0_i32, %c0_i32_0 : i32, i32
  }
  func.func @transform_4(%arg0: i32) -> (i32, i32) {
    %c0_i32 = arith.constant 0 : i32
    %c0_i32_0 = arith.constant 0 : i32
    return %c0_i32, %arg0 : i32, i32
  }
  func.func @transform_5(%arg0: i32) -> (i32, i32) {
    %c0_i32 = arith.constant 0 : i32
    %c0_i32_0 = arith.constant 0 : i32
    %c0_i32_1 = arith.constant 0 : i32
    return %c0_i32, %c0_i32_0 : i32, i32
  }
  func.func @transform_6(%arg0: i32) -> (i32, i32) {
    %c0_i32 = arith.constant 0 : i32
    %c0_i32_0 = arith.constant 0 : i32
    return %c0_i32, %arg0 : i32, i32
  }
  func.func @transform_7(%arg0: i32) -> (i32, i32) {
    %c0_i32 = arith.constant 0 : i32
    %c0_i32_0 = arith.constant 0 : i32
    %c0_i32_1 = arith.constant 0 : i32
    return %c0_i32, %c0_i32_0 : i32, i32
  }
}

</mosaic_0001>

<llo_original>
// kernel: tpu_custom_call.1
$region0: #{tpu_custom_call.1}
  #allocation0 [shape = 'u32[]', space=smem, size = 0x4, offset = 0x4, fixed_abs, tag = 'smem constant byte address 0x4 - core index']
  #allocation1 [shape = 'u32[144,128]{1,0:T(1,128)}', space=vmem, size = 0x12000, scoped, tag = 'internal scratch']
  #allocation2 [shape = 'f32[8,32]{1,0:T(8,128)}', space=vmem, size = 0x1000, scoped, tag = 'scratch operand']
  %s0 = inlined_call_operand.vmem [shape: f32[8,16], index: 0, kind: input, shape index: {}]
  %s1 = inlined_call_operand.vmem [shape: f32[8,32], index: 1, kind: input, shape index: {}]
  %s2 = inlined_call_operand.vmem [shape: f32[8,8,64], index: 2, kind: input, shape index: {}]
  %s3 = inlined_call_operand.vmem [shape: f32[112,96], index: 3, kind: input, shape index: {}]
  %s4 = inlined_call_operand.vmem [shape: f32[40,128], index: 4, kind: input, shape index: {}]
  %s5 = inlined_call_operand.vmem [shape: f32[4,128], index: 5, kind: input, shape index: {}]
  %s6 = inlined_call_operand.hbm [shape: f32[8,128], index: 6, kind: output, shape index: {0}]
  %s7 = inlined_call_operand.hbm [shape: f32[8,32], index: 7, kind: output, shape index: {1}]
  %8 = xla_tuple %s6, %s7
  %s9 = sld [smem:[#allocation0]]
  $region46: #{tpu_custom_call.1} parent=0
    _
  %s11 = ssub.s32 1, %s9
  %s12 = scalar_select 0, %s11, %s9
  $region1: #{tpu_custom_call.1} parent=0
    #allocation3 [shape = 'u8[4096]{0}', space=vmem, size = 0x1000, scoped, tag = 'output window, operand 0, single buffered']
    #allocation4 [shape = 's32[1]{0}', space=sflag, size = 0x4, scoped, tag = 'scoped memory for tpu_custom_call.1']
    #allocation5 [shape = 'u8[4096]{0}', space=vmem, size = 0x1000, scoped, tag = 'output window, operand 1, single buffered']
    #allocation6 [shape = 's32[1]{0}', space=sflag, size = 0x4, scoped, tag = 'scoped memory for tpu_custom_call.1']
    %13 = vsyncpa [#allocation4], 0
    %14 = vsyncpa [#allocation6], 0
    // Predicated region
    $region2: #{tpu_custom_call.1} parent=1 // pred_check
      _
    $region3: #{tpu_custom_call.1} parent=1 // pred_check_branch
      %16 = sbr.rel (0) target = $region5
    $region4: #{tpu_custom_call.1} parent=1 // pred_region
      _
    $region5: #{tpu_custom_call.1} parent=1 // pred_fallthru
      _
    // Predicated region
    $region6: #{tpu_custom_call.1} parent=1 // pred_check
      _
    $region7: #{tpu_custom_call.1} parent=1 // pred_check_branch
      %18 = sbr.rel (0) target = $region9
    $region8: #{tpu_custom_call.1} parent=1 // pred_region
      _
    $region9: #{tpu_custom_call.1} parent=1 // pred_fallthru
      _
    // Predicated region
    $region10: #{tpu_custom_call.1} parent=1 // pred_check
      _
    $region11: #{tpu_custom_call.1} parent=1 // pred_check_branch
      %20 = sbr.rel (0) target = $region13
    $region12: #{tpu_custom_call.1} parent=1 // pred_region
      _
    $region13: #{tpu_custom_call.1} parent=1 // pred_fallthru
      _
    // Predicated region
    $region14: #{tpu_custom_call.1} parent=1 // pred_check
      _
    $region15: #{tpu_custom_call.1} parent=1 // pred_check_branch
      %22 = sbr.rel (0) target = $region17
    $region16: #{tpu_custom_call.1} parent=1 // pred_region
      _
    $region17: #{tpu_custom_call.1} parent=1 // pred_fallthru
      _
    // Predicated region
    $region18: #{tpu_custom_call.1} parent=1 // pred_check
      _
    $region19: #{tpu_custom_call.1} parent=1 // pred_check_branch
      %24 = sbr.rel (0) target = $region21
    $region20: #{tpu_custom_call.1} parent=1 // pred_region
      _
    $region21: #{tpu_custom_call.1} parent=1 // pred_fallthru
      _
    // Predicated region
    $region22: #{tpu_custom_call.1} parent=1 // pred_check
      _
    $region23: #{tpu_custom_call.1} parent=1 // pred_check_branch
      %26 = sbr.rel (0) target = $region25
    $region24: #{tpu_custom_call.1} parent=1 // pred_region
      _
    $region25: #{tpu_custom_call.1} parent=1 // pred_fallthru
      _
    %p27 = scmp.eq.s32.totalorder 0, 0
    // Predicated region
    $region26: #{tpu_custom_call.1} parent=1 // pred_check
      %p28 = pneg %p27
    $region27: #{tpu_custom_call.1} parent=1 // pred_check_branch
      %30 = sbr.rel (%p28) target = $region29
    $region28: #{tpu_custom_call.1} parent=1 // pred_region
      %v31 = vld [vmem:[%s0] sm:$0xff]
      %v32 = vld [vmem:[%s1] sm:$0xff]
      %v33 = vld [vmem:[%s2] sm:$0xff]
      %v34 = vld [vmem:[%s2 + $0x8] sm:$0xff]
      %v35 = vld [vmem:[%s2 + $0x10] sm:$0xff]
      %v36 = vld [vmem:[%s2 + $0x18] sm:$0xff]
      %v37 = vld [vmem:[%s2 + $0x20] sm:$0xff]
      %v38 = vld [vmem:[%s2 + $0x28] sm:$0xff]
      %v39 = vld [vmem:[%s2 + $0x30] sm:$0xff]
      %v40 = vld [vmem:[%s2 + $0x38] sm:$0xff]
      %v41 = vld [vmem:[%s5] sm:$0x1]
      %v42 = vld [vmem:[%s5 + $0x1] sm:$0x1]
      %v43 = vld [vmem:[%s5 + $0x2] sm:$0x1]
      %v44 = vld [vmem:[%s5 + $0x3] sm:$0x1]
      %v45 = vlaneseq
      %v46 = vshrl.u32 %v45, 7
      %v47 = vsub.s32 0, %v46
      %v48 = vrot.slane %v41, %v47
      %v49 = vmul.f32 %v32, %v48
      %vm50 = vcmask 261120
      %v51 = vsel %vm50, %v49, 0.0
      %52 = vadd.xlane.f32.xlu0 %v51
      %v53 = vpop.xlane.xlu0 %52
      %55 = vrot.lane.b32.xlu0 %v48, 96
      %v56 = vpop.permute.xlu0 %55
      %v58 = vmul.f32 %v33, %v56
      %v59 = vmul.f32 %v34, %v56
      %v60 = vmul.f32 %v35, %v56
      %v61 = vmul.f32 %v36, %v56
      %v62 = vmul.f32 %v37, %v56
      %v63 = vmul.f32 %v38, %v56
      %v64 = vmul.f32 %v39, %v56
      %v65 = vmul.f32 %v40, %v56
      %vm66 = vcmask 523264
      %v67 = vsel %vm66, %v58, 0.0
      %68 = vadd.xlane.f32.xlu0 %v67
      %v69 = vpop.xlane.xlu0 %68
      %v70 = vsel %vm66, %v59, 0.0
      %71 = vadd.xlane.f32.xlu0 %v70
      %v72 = vpop.xlane.xlu0 %71
      %v73 = vsel %vm66, %v60, 0.0
      %74 = vadd.xlane.f32.xlu0 %v73
      %v75 = vpop.xlane.xlu0 %74
      %v76 = vsel %vm66, %v61, 0.0
      %77 = vadd.xlane.f32.xlu0 %v76
      %v78 = vpop.xlane.xlu0 %77
      %v79 = vsel %vm66, %v62, 0.0
      %80 = vadd.xlane.f32.xlu0 %v79
      %v81 = vpop.xlane.xlu0 %80
      %v82 = vsel %vm66, %v63, 0.0
      %83 = vadd.xlane.f32.xlu0 %v82
      %v84 = vpop.xlane.xlu0 %83
      %v85 = vsel %vm66, %v64, 0.0
      %86 = vadd.xlane.f32.xlu0 %v85
      %v87 = vpop.xlane.xlu0 %86
      %v88 = vsel %vm66, %v65, 0.0
      %89 = vadd.xlane.f32.xlu0 %v88
      %v90 = vpop.xlane.xlu0 %89
      %v99 = vlaneseq
      %v100 = vand.u32 %v99, 127
      %v101 = vlaneseq
      %v102 = vshrl.u32 %v101, 7
      %v103 = vsub.s32 %v100, %v102
      %v104 = vrot.slane %v69, %v103
      %v105 = vlaneseq
      %v106 = vshrl.u32 %v105, 7
      %v107 = vsub.s32 %v100, %v106
      %v108 = vrot.slane %v72, %v107
      %v109 = vlaneseq
      %v110 = vshrl.u32 %v109, 7
      %v111 = vsub.s32 %v100, %v110
      %v112 = vrot.slane %v75, %v111
      %v113 = vlaneseq
      %v114 = vshrl.u32 %v113, 7
      %v115 = vsub.s32 %v100, %v114
      %v116 = vrot.slane %v78, %v115
      %v117 = vlaneseq
      %v118 = vshrl.u32 %v117, 7
      %v119 = vsub.s32 %v100, %v118
      %v120 = vrot.slane %v81, %v119
      %v121 = vlaneseq
      %v122 = vshrl.u32 %v121, 7
      %v123 = vsub.s32 %v100, %v122
      %v124 = vrot.slane %v84, %v123
      %v125 = vlaneseq
      %v126 = vshrl.u32 %v125, 7
      %v127 = vsub.s32 %v100, %v126
      %v128 = vrot.slane %v87, %v127
      %v129 = vlaneseq
      %v130 = vshrl.u32 %v129, 7
      %v131 = vsub.s32 %v100, %v130
      %v132 = vrot.slane %v90, %v131
      %vm133 = vcmask 1041409
      %v134 = vsel %vm133, %v108, %v104
      %vm135 = vcmask 1042434
      %v136 = vsel %vm135, %v112, %v134
      %vm137 = vcmask 1043459
      %v138 = vsel %vm137, %v116, %v136
      %vm139 = vcmask 1044484
      %v140 = vsel %vm139, %v120, %v138
      %vm141 = vcmask 1045509
      %v142 = vsel %vm141, %v124, %v140
      %vm143 = vcmask 1046534
      %v144 = vsel %vm143, %v128, %v142
      %vm145 = vcmask 1047559
      %v146 = vsel %vm145, %v132, %v144
      %v148 = vadd.f32 %v53, %v146
      %s150 = vtos %v44
      %v151 = vstv %s150
      %v153 = vadd.f32 %v148, %v151
      %v154 = vmax.f32 %v153, 0.0
      %vm155 = vcmask 64512
      %v156 = vsel %vm155, %v154, -inf
      %157 = vmax.xlane.f32.xlu0 %v156
      %v158 = vpop.xlane.xlu0 %157
      %v159 = vsub.f32 %v154, %v158
      %v160 = vmul.f32 %v159, 1.442695
      %v161 = vpow.pop %v160
      %v162 = vsel %vm155, %v161, 0.0
      %163 = vadd.xlane.f32.xlu0 %v162
      %v164 = vpop.xlane.xlu0 %163
      %v165 = vrcp.pop %v164
      %v166 = vmul.f32 %v161, %v165
      %v167 = vlaneseq
      %v168 = vshrl.u32 %v167, 7
      %v169 = vsub.s32 0, %v168
      %v170 = vrot.slane %v166, %v169
      %172 = vbcast.lane.b32.xlu0 %v170, 256
      %v173 = vpop.permute.xlu0 %172
      %v174 = vlaneseq
      %v175 = vshrl.u32 %v174, 7
      %v176 = vsub.s32 1, %v175
      %v177 = vrot.slane %v166, %v176
      %179 = vbcast.lane.b32.xlu0 %v177, 256
      %v180 = vpop.permute.xlu0 %179
      %v181 = vlaneseq
      %v182 = vshrl.u32 %v181, 7
      %v183 = vsub.s32 2, %v182
      %v184 = vrot.slane %v166, %v183
      %186 = vbcast.lane.b32.xlu0 %v184, 256
      %v187 = vpop.permute.xlu0 %186
      %v188 = vlaneseq
      %v189 = vshrl.u32 %v188, 7
      %v190 = vsub.s32 3, %v189
      %v191 = vrot.slane %v166, %v190
      %193 = vbcast.lane.b32.xlu0 %v191, 256
      %v194 = vpop.permute.xlu0 %193
      %v195 = vlaneseq
      %v196 = vshrl.u32 %v195, 7
      %v197 = vsub.s32 4, %v196
      %v198 = vrot.slane %v166, %v197
      %200 = vbcast.lane.b32.xlu0 %v198, 256
      %v201 = vpop.permute.xlu0 %200
      %v202 = vlaneseq
      %v203 = vshrl.u32 %v202, 7
      %v204 = vsub.s32 5, %v203
      %v205 = vrot.slane %v166, %v204
      %207 = vbcast.lane.b32.xlu0 %v205, 256
      %v208 = vpop.permute.xlu0 %207
      %v209 = vlaneseq
      %v210 = vshrl.u32 %v209, 7
      %v211 = vsub.s32 6, %v210
      %v212 = vrot.slane %v166, %v211
      %214 = vbcast.lane.b32.xlu0 %v212, 256
      %v215 = vpop.permute.xlu0 %214
      %v216 = vlaneseq
      %v217 = vshrl.u32 %v216, 7
      %v218 = vsub.s32 7, %v217
      %v219 = vrot.slane %v166, %v218
      %221 = vbcast.lane.b32.xlu0 %v219, 256
      %v222 = vpop.permute.xlu0 %221
      %v223 = vmul.f32 %v173, %v33
      %v224 = vmul.f32 %v180, %v34
      %v225 = vmul.f32 %v187, %v35
      %v226 = vmul.f32 %v194, %v36
      %v227 = vmul.f32 %v201, %v37
      %v228 = vmul.f32 %v208, %v38
      %v229 = vmul.f32 %v215, %v39
      %v230 = vmul.f32 %v222, %v40
      %v231 = vsel %vm66, %v223, 0.0
      %v232 = vrot.slane %v231, 4
      %v233 = vadd.f32 %v231, %v232
      %v234 = vrot.slane %v233, 2
      %v235 = vadd.f32 %v233, %v234
      %v236 = vrot.slane %v235, 1
      %v237 = vadd.f32 %v235, %v236
      %v238 = vsel %vm66, %v224, 0.0
      %v239 = vrot.slane %v238, 4
      %v240 = vadd.f32 %v238, %v239
      %v241 = vrot.slane %v240, 2
      %v242 = vadd.f32 %v240, %v241
      %v243 = vrot.slane %v242, 1
      %v244 = vadd.f32 %v242, %v243
      %v245 = vsel %vm66, %v225, 0.0
      %v246 = vrot.slane %v245, 4
      %v247 = vadd.f32 %v245, %v246
      %v248 = vrot.slane %v247, 2
      %v249 = vadd.f32 %v247, %v248
      %v250 = vrot.slane %v249, 1
      %v251 = vadd.f32 %v249, %v250
      %v252 = vsel %vm66, %v226, 0.0
      %v253 = vrot.slane %v252, 4
      %v254 = vadd.f32 %v252, %v253
      %v255 = vrot.slane %v254, 2
      %v256 = vadd.f32 %v254, %v255
      %v257 = vrot.slane %v256, 1
      %v258 = vadd.f32 %v256, %v257
      %v259 = vsel %vm66, %v227, 0.0
      %v260 = vrot.slane %v259, 4
      %v261 = vadd.f32 %v259, %v260
      %v262 = vrot.slane %v261, 2
      %v263 = vadd.f32 %v261, %v262
      %v264 = vrot.slane %v263, 1
      %v265 = vadd.f32 %v263, %v264
      %v266 = vsel %vm66, %v228, 0.0
      %v267 = vrot.slane %v266, 4
      %v268 = vadd.f32 %v266, %v267
      %v269 = vrot.slane %v268, 2
      %v270 = vadd.f32 %v268, %v269
      %v271 = vrot.slane %v270, 1
      %v272 = vadd.f32 %v270, %v271
      %v273 = vsel %vm66, %v229, 0.0
      %v274 = vrot.slane %v273, 4
      %v275 = vadd.f32 %v273, %v274
      %v276 = vrot.slane %v275, 2
      %v277 = vadd.f32 %v275, %v276
      %v278 = vrot.slane %v277, 1
      %v279 = vadd.f32 %v277, %v278
      %v280 = vsel %vm66, %v230, 0.0
      %v281 = vrot.slane %v280, 4
      %v282 = vadd.f32 %v280, %v281
      %v283 = vrot.slane %v282, 2
      %v284 = vadd.f32 %v282, %v283
      %v285 = vrot.slane %v284, 1
      %v286 = vadd.f32 %v284, %v285
      %v287 = vld [vmem:[%s3] sm:$0xff]
      %v288 = vld [vmem:[%s3 + $0x8] sm:$0xff]
      %v289 = vld [vmem:[%s3 + $0x10] sm:$0xff]
      %v290 = vld [vmem:[%s3 + $0x18] sm:$0xff]
      %v291 = vld [vmem:[%s3 + $0x20] sm:$0xff]
      %v292 = vld [vmem:[%s3 + $0x28] sm:$0xff]
      %v293 = vld [vmem:[%s3 + $0x30] sm:$0xff]
      %v294 = vld [vmem:[%s3 + $0x38] sm:$0xff]
      %v295 = vld [vmem:[%s3 + $0x40] sm:$0xff]
      %v296 = vld [vmem:[%s3 + $0x48] sm:$0xff]
      %v297 = vld [vmem:[%s3 + $0x50] sm:$0xff]
      %v298 = vld [vmem:[%s3 + $0x58] sm:$0xff]
      %v299 = vld [vmem:[%s3 + $0x60] sm:$0xff]
      %v300 = vld [vmem:[%s3 + $0x68] sm:$0xff]
      %v309 = vsel %vm133, %v244, %v237
      %v310 = vsel %vm135, %v251, %v309
      %v311 = vsel %vm137, %v258, %v310
      %v312 = vsel %vm139, %v265, %v311
      %v313 = vsel %vm141, %v272, %v312
      %v314 = vsel %vm143, %v279, %v313
      %v315 = vsel %vm145, %v286, %v314
      %v316 = vsel %vm66, %v315, 0
      %318 = vmatprep.subr.mxu0 0.0
      %319 = vmatpush1.msra.mxu0 0.0
      %320 = vmatprep.subr.mxu0 0.0
      %321 = vmatpush1.msra.mxu0 0.0
      %322 = vmatprep.subr.mxu0 0.0
      %323 = vmatpush1.msra.mxu0 0.0
      %324 = vmatprep.subr.mxu0 0.0
      %325 = vmatpush1.msra.mxu0 0.0
      %326 = vmatprep.subr.mxu0 0.0
      %327 = vmatpush1.msra.mxu0 0.0
      %328 = vmatprep.subr.mxu0 0.0
      %329 = vmatpush1.msra.mxu0 0.0
      %330 = vmatprep.subr.mxu0 0.0
      %331 = vmatpush1.msra.mxu0 0.0
      %332 = vmatprep.subr.mxu0 0.0
      %333 = vmatpush1.msra.mxu0 0.0
      %334 = vmatprep.subr.mxu0 0.0
      %335 = vmatpush1.msra.mxu0 %v296
      %336 = vmatprep.subr.mxu0 0.0
      %337 = vmatpush1.msra.mxu0 %v295
      %338 = vmatprep.subr.mxu0 0.0
      %339 = vmatpush1.msra.mxu0 %v294
      %340 = vmatprep.subr.mxu0 0.0
      %341 = vmatpush1.msra.mxu0 %v293
      %342 = vmatprep.subr.mxu0 0.0
      %343 = vmatpush1.msra.mxu0 %v292
      %344 = vmatprep.subr.mxu0 0.0
      %345 = vmatpush1.msra.mxu0 %v291
      %346 = vmatprep.subr.mxu0 0.0
      %347 = vmatpush1.msra.mxu0 %v290
      %348 = vmatprep.subr.mxu0 0.0
      %349 = vmatpush1.msra.mxu0 %v289
      %350 = vmatprep.subr.mxu0 0.0
      %351 = vmatpush2.msra.mxu0 0.0
      %352 = vmatprep.subr.mxu0 0.0
      %353 = vmatpush2.msra.mxu0 0.0
      %354 = vmatprep.subr.mxu0 0.0
      %355 = vmatpush2.msra.mxu0 0.0
      %356 = vmatprep.subr.mxu0 0.0
      %357 = vmatpush2.msra.mxu0 0.0
      %358 = vmatprep.subr.mxu0 0.0
      %359 = vmatpush2.msra.mxu0 0.0
      %360 = vmatprep.subr.mxu0 0.0
      %361 = vmatpush2.msra.mxu0 0.0
      %362 = vmatprep.subr.mxu0 0.0
      %363 = vmatpush2.msra.mxu0 0.0
      %364 = vmatprep.subr.mxu0 0.0
      %365 = vmatpush2.msra.mxu0 0.0
      %366 = vmatprep.subr.mxu0 0.0
      %367 = vmatpush2.msra.mxu0 0.0
      %368 = vmatprep.subr.mxu0 0.0
      %369 = vmatpush2.msra.mxu0 0.0
      %370 = vmatprep.subr.mxu0 0.0
      %371 = vmatpush2.msra.mxu0 0.0
      %372 = vmatprep.subr.mxu0 0.0
      %373 = vmatpush2.msra.mxu0 0.0
      %374 = vmatprep.subr.mxu0 0.0
      %375 = vmatpush2.msra.mxu0 0.0
      %376 = vmatprep.subr.mxu0 0.0
      %377 = vmatpush2.msra.mxu0 0.0
      %378 = vmatprep.subr.mxu0 0.0
      %379 = vmatpush2.msra.mxu0 0.0
      %380 = vmatprep.subr.mxu0 0.0
      %381 = vmatpush2.msra.mxu0 0.0
      %382 = vmatprep.mubr.f32.mxu0 0.0
      %383 = vmatmul.mubr.f32.gmra.mxu0 %v316
      %v384 = vpop.f32.mrf.mxu0
      %v385 = vadd.f32 0.0, %v384
      %v386 = vpop.f32.mrf.mxu0
      %387 = vdwg.mxu0
      %vm388 = vcmask 130048
      %v390 = vsel %vm388, %v31, 0
      %392 = vmatprep.subr.mxu0 0.0
      %393 = vmatpush1.msra.mxu0 0.0
      %394 = vmatprep.subr.mxu0 0.0
      %395 = vmatpush1.msra.mxu0 0.0
      %396 = vmatprep.subr.mxu0 0.0
      %397 = vmatpush1.msra.mxu0 0.0
      %398 = vmatprep.subr.mxu0 0.0
      %399 = vmatpush1.msra.mxu0 0.0
      %400 = vmatprep.subr.mxu0 0.0
      %401 = vmatpush1.msra.mxu0 0.0
      %402 = vmatprep.subr.mxu0 0.0
      %403 = vmatpush1.msra.mxu0 0.0
      %404 = vmatprep.subr.mxu0 0.0
      %405 = vmatpush1.msra.mxu0 0.0
      %406 = vmatprep.subr.mxu0 0.0
      %407 = vmatpush1.msra.mxu0 0.0
      %408 = vmatprep.subr.mxu0 0.0
      %409 = vmatpush1.msra.mxu0 0.0
      %410 = vmatprep.subr.mxu0 0.0
      %411 = vmatpush1.msra.mxu0 0.0
      %412 = vmatprep.subr.mxu0 0.0
      %413 = vmatpush1.msra.mxu0 0.0
      %414 = vmatprep.subr.mxu0 0.0
      %415 = vmatpush1.msra.mxu0 0.0
      %416 = vmatprep.subr.mxu0 0.0
      %417 = vmatpush1.msra.mxu0 0.0
      %418 = vmatprep.subr.mxu0 0.0
      %419 = vmatpush1.msra.mxu0 0.0
      %420 = vmatprep.subr.mxu0 0.0
      %421 = vmatpush1.msra.mxu0 %v288
      %422 = vmatprep.subr.mxu0 0.0
      %423 = vmatpush1.msra.mxu0 %v287
      %424 = vmatprep.subr.mxu0 0.0
      %425 = vmatpush2.msra.mxu0 0.0
      %426 = vmatprep.subr.mxu0 0.0
      %427 = vmatpush2.msra.mxu0 0.0
      %428 = vmatprep.subr.mxu0 0.0
      %429 = vmatpush2.msra.mxu0 0.0
      %430 = vmatprep.subr.mxu0 0.0
      %431 = vmatpush2.msra.mxu0 0.0
      %432 = vmatprep.subr.mxu0 0.0
      %433 = vmatpush2.msra.mxu0 0.0
      %434 = vmatprep.subr.mxu0 0.0
      %435 = vmatpush2.msra.mxu0 0.0
      %436 = vmatprep.subr.mxu0 0.0
      %437 = vmatpush2.msra.mxu0 0.0
      %438 = vmatprep.subr.mxu0 0.0
      %439 = vmatpush2.msra.mxu0 0.0
      %440 = vmatprep.subr.mxu0 0.0
      %441 = vmatpush2.msra.mxu0 0.0
      %442 = vmatprep.subr.mxu0 0.0
      %443 = vmatpush2.msra.mxu0 0.0
      %444 = vmatprep.subr.mxu0 0.0
      %445 = vmatpush2.msra.mxu0 0.0
      %446 = vmatprep.subr.mxu0 0.0
      %447 = vmatpush2.msra.mxu0 0.0
      %448 = vmatprep.subr.mxu0 0.0
      %449 = vmatpush2.msra.mxu0 0.0
      %450 = vmatprep.subr.mxu0 0.0
      %451 = vmatpush2.msra.mxu0 0.0
      %452 = vmatprep.subr.mxu0 0.0
      %453 = vmatpush2.msra.mxu0 0.0
      %454 = vmatprep.subr.mxu0 0.0
      %455 = vmatpush2.msra.mxu0 0.0
      %456 = vmatprep.mubr.f32.mxu0 0.0
      %457 = vmatmul.mubr.f32.gmra.mxu0 %v390
      %v458 = vpop.f32.mrf.mxu0
      %v459 = vadd.f32 %v385, %v458
      %v460 = vpop.f32.mrf.mxu0
      %461 = vdwg.mxu0
      %v462 = vlaneseq
      %v463 = vshrl.u32 %v462, 7
      %v464 = vsub.s32 0, %v463
      %v465 = vrot.slane %v42, %v464
      %v466 = vadd.f32 %v459, %v465
      %v467 = vlaneseq
      %v468 = vshrl.u32 %v467, 7
      %v469 = vsub.s32 0, %v468
      %v470 = vrot.slane %v43, %v469
      %v472 = vsel %vm50, %v32, 0
      %474 = vmatprep.subr.mxu0 0.0
      %475 = vmatpush1.msra.mxu0 0.0
      %476 = vmatprep.subr.mxu0 0.0
      %477 = vmatpush1.msra.mxu0 0.0
      %478 = vmatprep.subr.mxu0 0.0
      %479 = vmatpush1.msra.mxu0 0.0
      %480 = vmatprep.subr.mxu0 0.0
      %481 = vmatpush1.msra.mxu0 0.0
      %482 = vmatprep.subr.mxu0 0.0
      %483 = vmatpush1.msra.mxu0 0.0
      %484 = vmatprep.subr.mxu0 0.0
      %485 = vmatpush1.msra.mxu0 0.0
      %486 = vmatprep.subr.mxu0 0.0
      %487 = vmatpush1.msra.mxu0 0.0
      %488 = vmatprep.subr.mxu0 0.0
      %489 = vmatpush1.msra.mxu0 0.0
      %490 = vmatprep.subr.mxu0 0.0
      %491 = vmatpush1.msra.mxu0 0.0
      %492 = vmatprep.subr.mxu0 0.0
      %493 = vmatpush1.msra.mxu0 0.0
      %494 = vmatprep.subr.mxu0 0.0
      %495 = vmatpush1.msra.mxu0 0.0
      %496 = vmatprep.subr.mxu0 0.0
      %497 = vmatpush1.msra.mxu0 0.0
      %498 = vmatprep.subr.mxu0 0.0
      %499 = vmatpush1.msra.mxu0 %v300
      %500 = vmatprep.subr.mxu0 0.0
      %501 = vmatpush1.msra.mxu0 %v299
      %502 = vmatprep.subr.mxu0 0.0
      %503 = vmatpush1.msra.mxu0 %v298
      %504 = vmatprep.subr.mxu0 0.0
      %505 = vmatpush1.msra.mxu0 %v297
      %506 = vmatprep.subr.mxu0 0.0
      %507 = vmatpush2.msra.mxu0 0.0
      %508 = vmatprep.subr.mxu0 0.0
      %509 = vmatpush2.msra.mxu0 0.0
      %510 = vmatprep.subr.mxu0 0.0
      %511 = vmatpush2.msra.mxu0 0.0
      %512 = vmatprep.subr.mxu0 0.0
      %513 = vmatpush2.msra.mxu0 0.0
      %514 = vmatprep.subr.mxu0 0.0
      %515 = vmatpush2.msra.mxu0 0.0
      %516 = vmatprep.subr.mxu0 0.0
      %517 = vmatpush2.msra.mxu0 0.0
      %518 = vmatprep.subr.mxu0 0.0
      %519 = vmatpush2.msra.mxu0 0.0
      %520 = vmatprep.subr.mxu0 0.0
      %521 = vmatpush2.msra.mxu0 0.0
      %522 = vmatprep.subr.mxu0 0.0
      %523 = vmatpush2.msra.mxu0 0.0
      %524 = vmatprep.subr.mxu0 0.0
      %525 = vmatpush2.msra.mxu0 0.0
      %526 = vmatprep.subr.mxu0 0.0
      %527 = vmatpush2.msra.mxu0 0.0
      %528 = vmatprep.subr.mxu0 0.0
      %529 = vmatpush2.msra.mxu0 0.0
      %530 = vmatprep.subr.mxu0 0.0
      %531 = vmatpush2.msra.mxu0 0.0
      %532 = vmatprep.subr.mxu0 0.0
      %533 = vmatpush2.msra.mxu0 0.0
      %534 = vmatprep.subr.mxu0 0.0
      %535 = vmatpush2.msra.mxu0 0.0
      %536 = vmatprep.subr.mxu0 0.0
      %537 = vmatpush2.msra.mxu0 0.0
      %538 = vmatprep.mubr.f32.mxu0 0.0
      %539 = vmatmul.mubr.f32.gmra.mxu0 %v472
      %v540 = vpop.f32.mrf.mxu0
      %v541 = vadd.f32 %v470, %v540
      %v542 = vpop.f32.mrf.mxu0
      %543 = vdwg.mxu0
      %v544 = vadd.f32 %v466, %v541
      %v545 = vxor.u32 %v544, 2147483648
      %v546 = vmul.f32 %v545, 1.442695
      %v547 = vpow.pop %v546
      %v548 = vadd.f32 %v547, 1.0
      %v549 = vrcp.pop %v548
      %v550 = vmul.f32 1.0, %v549
      %552 = vrot.lane.b32.xlu0 %v541, 64
      %v553 = vpop.permute.xlu0 %552
      %v555 = vmul.f32 %v550, %v553
      %557 = vrot.lane.b32.xlu0 %v555, 64
      %v558 = vpop.permute.xlu0 %557
      %v560 = vadd.f32 %v466, %v558
      %v561 = vtanh.pop %v560
      %v562 = vsub.f32 1.0, %v550
      %564 = vrot.lane.b32.xlu0 %v561, 96
      %v565 = vpop.permute.xlu0 %564
      %v567 = vmul.f32 %v562, %v565
      %568 = vrot.lane.b32.xlu0 %v32, 32
      %v569 = vpop.permute.xlu0 %568
      %v571 = vmul.f32 %v550, %v569
      %v572 = vadd.f32 %v567, %v571
      %574 = vrot.lane.b32.xlu0 %v572, 96
      %v575 = vpop.permute.xlu0 %574
      %577 = vst.msk [vmem:[#allocation2] sm:$0xff] %vm50, %v575
      %578 = vst.msk [vmem:[#allocation5] sm:$0xff] %vm50, %v575
    $region29: #{tpu_custom_call.1} parent=1 // pred_fallthru
      _
    %v579 = vld [vmem:[#allocation2] sm:$0xff]
    %v580 = vld [vmem:[%s4] sm:$0xff]
    %v581 = vld [vmem:[%s4 + $0x8] sm:$0xff]
    %v582 = vld [vmem:[%s4 + $0x10] sm:$0xff]
    %v583 = vld [vmem:[%s4 + $0x18] sm:$0xff]
    %v584 = vld [vmem:[%s4 + $0x20] sm:$0x1]
    %v585 = vlaneseq
    %v586 = vshrl.u32 %v585, 7
    %v587 = vsub.s32 0, %v586
    %v588 = vrot.slane %v584, %v587
    %vm589 = vcmask 261120
    %v591 = vsel %vm589, %v579, 0
    %593 = vmatprep.subr.mxu0 0.0
    %594 = vmatpush1.msra.mxu0 0.0
    %595 = vmatprep.subr.mxu0 0.0
    %596 = vmatpush1.msra.mxu0 0.0
    %597 = vmatprep.subr.mxu0 0.0
    %598 = vmatpush1.msra.mxu0 0.0
    %599 = vmatprep.subr.mxu0 0.0
    %600 = vmatpush1.msra.mxu0 0.0
    %601 = vmatprep.subr.mxu0 0.0
    %602 = vmatpush1.msra.mxu0 0.0
    %603 = vmatprep.subr.mxu0 0.0
    %604 = vmatpush1.msra.mxu0 0.0
    %605 = vmatprep.subr.mxu0 0.0
    %606 = vmatpush1.msra.mxu0 0.0
    %607 = vmatprep.subr.mxu0 0.0
    %608 = vmatpush1.msra.mxu0 0.0
    %609 = vmatprep.subr.mxu0 0.0
    %610 = vmatpush1.msra.mxu0 0.0
    %611 = vmatprep.subr.mxu0 0.0
    %612 = vmatpush1.msra.mxu0 0.0
    %613 = vmatprep.subr.mxu0 0.0
    %614 = vmatpush1.msra.mxu0 0.0
    %615 = vmatprep.subr.mxu0 0.0
    %616 = vmatpush1.msra.mxu0 0.0
    %617 = vmatprep.subr.mxu0 0.0
    %618 = vmatpush1.msra.mxu0 %v583
    %619 = vmatprep.subr.mxu0 0.0
    %620 = vmatpush1.msra.mxu0 %v582
    %621 = vmatprep.subr.mxu0 0.0
    %622 = vmatpush1.msra.mxu0 %v581
    %623 = vmatprep.subr.mxu0 0.0
    %624 = vmatpush1.msra.mxu0 %v580
    %625 = vmatprep.subr.mxu0 0.0
    %626 = vmatpush2.msra.mxu0 0.0
    %627 = vmatprep.subr.mxu0 0.0
    %628 = vmatpush2.msra.mxu0 0.0
    %629 = vmatprep.subr.mxu0 0.0
    %630 = vmatpush2.msra.mxu0 0.0
    %631 = vmatprep.subr.mxu0 0.0
    %632 = vmatpush2.msra.mxu0 0.0
    %633 = vmatprep.subr.mxu0 0.0
    %634 = vmatpush2.msra.mxu0 0.0
    %635 = vmatprep.subr.mxu0 0.0
    %636 = vmatpush2.msra.mxu0 0.0
    %637 = vmatprep.subr.mxu0 0.0
    %638 = vmatpush2.msra.mxu0 0.0
    %639 = vmatprep.subr.mxu0 0.0
    %640 = vmatpush2.msra.mxu0 0.0
    %641 = vmatprep.subr.mxu0 0.0
    %642 = vmatpush2.msra.mxu0 0.0
    %643 = vmatprep.subr.mxu0 0.0
    %644 = vmatpush2.msra.mxu0 0.0
    %645 = vmatprep.subr.mxu0 0.0
    %646 = vmatpush2.msra.mxu0 0.0
    %647 = vmatprep.subr.mxu0 0.0
    %648 = vmatpush2.msra.mxu0 0.0
    %649 = vmatprep.subr.mxu0 0.0
    %650 = vmatpush2.msra.mxu0 0.0
    %651 = vmatprep.subr.mxu0 0.0
    %652 = vmatpush2.msra.mxu0 0.0
    %653 = vmatprep.subr.mxu0 0.0
    %654 = vmatpush2.msra.mxu0 0.0
    %655 = vmatprep.subr.mxu0 0.0
    %656 = vmatpush2.msra.mxu0 0.0
    %657 = vmatprep.mubr.f32.mxu0 0.0
    %658 = vmatmul.mubr.f32.gmra.mxu0 %v591
    %v659 = vpop.f32.mrf.mxu0
    %v660 = vadd.f32 %v588, %v659
    %v661 = vpop.f32.mrf.mxu0
    %662 = vdwg.mxu0
    %663 = vst [vmem:[#allocation3] sm:$0xff] %v660
    // Predicated region
    $region30: #{tpu_custom_call.1} parent=1 // pred_check
      _
    $region31: #{tpu_custom_call.1} parent=1 // pred_check_branch
      %665 = sbr.rel (0) target = $region33
    $region32: #{tpu_custom_call.1} parent=1 // pred_region
      %s667 = ssub.s32 128, 128
      %668 = vsyncadd [#allocation4], %s667
      %s670 = sshll.u32 [#allocation3], 4
      %s671 = int_to_ptr.vmem [resolvable:$true] %s670
      %673 = dma.vmem_to_hbm [thread:$0]  %s671, 128, %s6, [#allocation4]
    $region33: #{tpu_custom_call.1} parent=1 // pred_fallthru
      _
    // Predicated region
    $region34: #{tpu_custom_call.1} parent=1 // pred_check
      _
    $region35: #{tpu_custom_call.1} parent=1 // pred_check_branch
      %675 = sbr.rel (0) target = $region37
    $region36: #{tpu_custom_call.1} parent=1 // pred_region
      %s677 = ssub.s32 128, 128
      %678 = vsyncadd [#allocation6], %s677
      %s680 = sshll.u32 [#allocation5], 4
      %s681 = int_to_ptr.vmem [resolvable:$true] %s680
      %683 = dma.vmem_to_hbm [thread:$0]  %s681, 128, %s7, [#allocation6]
    $region37: #{tpu_custom_call.1} parent=1 // pred_fallthru
      _
    // Predicated region
    $region38: #{tpu_custom_call.1} parent=1 // pred_check
      _
    $region39: #{tpu_custom_call.1} parent=1 // pred_check_branch
      %685 = sbr.rel (0) target = $region41
    $region40: #{tpu_custom_call.1} parent=1 // pred_region
      %686 = dma.done [#allocation4], 128
    $region41: #{tpu_custom_call.1} parent=1 // pred_fallthru
      _
    // Predicated region
    $region42: #{tpu_custom_call.1} parent=1 // pred_check
      _
    $region43: #{tpu_custom_call.1} parent=1 // pred_check_branch
      %688 = sbr.rel (0) target = $region45
    $region44: #{tpu_custom_call.1} parent=1 // pred_region
      %689 = dma.done [#allocation6], 128
    $region45: #{tpu_custom_call.1} parent=1 // pred_fallthru
      _
    %690 = vsyncpa [#allocation4], 1
    %691 = vsyncpa [#allocation6], 1

</llo_original>
